<compile_context>
chip_gen: v6e
topology: v6e:2x2x1
jax: 0.10.0
libtpu: 0.0.40
codegen_flags: <defaults>
</compile_context>

<pallas_src>
import functools

import jax
import jax.numpy as jnp
from jax.experimental import pallas as pl
from jax.experimental.pallas import tpu as pltpu

_LN_EPS = 1e-5          # torch.nn.LayerNorm default
_TM_MAX = 512           # M tile (rows per grid step)


def _layernorm_net_kernel(x_ref, w1_ref, b1_ref, g1_ref, be1_ref,
                          w3_ref, b3_ref, o_ref):
    # x_ref:  (TM, K) f32   w1_ref: (K, H) bf16   b1/g1/be1: (1, H) f32
    # w3_ref: (H, O) bf16   b3_ref: (1, O) f32    o_ref: (TM, O) f32
    # fc1 — bf16 operands on the MXU, f32 accumulation.
    h = jnp.dot(x_ref[...].astype(jnp.bfloat16), w1_ref[...],
                preferred_element_type=jnp.float32)
    h = h + b1_ref[...]
    # ln1 — single-pass stats: two independent cross-lane reductions.
    inv_h = 1.0 / h.shape[-1]
    s = jnp.sum(h, axis=-1, keepdims=True)
    s2 = jnp.sum(h * h, axis=-1, keepdims=True)
    mean = s * inv_h
    var = s2 * inv_h - mean * mean
    h = (h - mean) * jax.lax.rsqrt(var + _LN_EPS) * g1_ref[...] + be1_ref[...]
    # dropout (eval mode) -> identity ; relu
    h = jnp.maximum(h, 0.0)
    # fc3 — bf16 operands, f32 accumulation.
    out = jnp.dot(h.astype(jnp.bfloat16), w3_ref[...],
                  preferred_element_type=jnp.float32)
    o_ref[...] = (out + b3_ref[...]).astype(o_ref.dtype)


@functools.partial(jax.jit, static_argnames=("tm",))
def _layernorm_net_pallas(x2d, w1, b1, g1, be1, w3, b3, *, tm):
    M, K = x2d.shape
    H = w1.shape[1]
    O = w3.shape[1]
    grid = (pl.cdiv(M, tm),)

    flops = 2 * M * (K * H + H * O)
    bytes_accessed = (4 * (M * K + M * O + 3 * H + O)   # f32 x, out, vectors
                      + 2 * (K * H + H * O))            # bf16 weights

    return pl.pallas_call(
        _layernorm_net_kernel,
        out_shape=jax.ShapeDtypeStruct((M, O), jnp.float32),
        grid=grid,
        in_specs=[
            pl.BlockSpec((tm, K), lambda i: (i, 0)),   # x tile (streamed)
            pl.BlockSpec((K, H), lambda i: (0, 0)),    # w1 (resident, bf16)
            pl.BlockSpec((1, H), lambda i: (0, 0)),    # b1
            pl.BlockSpec((1, H), lambda i: (0, 0)),    # ln1 gamma
            pl.BlockSpec((1, H), lambda i: (0, 0)),    # ln1 beta
            pl.BlockSpec((H, O), lambda i: (0, 0)),    # w3 (resident, bf16)
            pl.BlockSpec((1, O), lambda i: (0, 0)),    # b3
        ],
        out_specs=pl.BlockSpec((tm, O), lambda i: (i, 0)),
        compiler_params=pltpu.CompilerParams(
            dimension_semantics=("parallel",),
        ),
        cost_estimate=pl.CostEstimate(
            flops=flops, transcendentals=M, bytes_accessed=bytes_accessed),
    )(x2d, w1, b1, g1, be1, w3, b3)


class LayerNormNetPallas:
    """JAX/Pallas equivalent of the PyTorch LayerNormNet forward pass."""

    def __init__(self, feature_dim, hidden_dim, out_dim, key):
        self.feature_dim = feature_dim
        self.hidden_dim = hidden_dim
        self.out_dim = out_dim

        def _linear_init(k, fan_in, fan_out):
            kw, kb = jax.random.split(k)
            bound = 1.0 / (fan_in ** 0.5)          # nn.Linear default init range
            # stored pre-transposed (in, out); weights kept in bf16 for the MXU
            w = jax.random.uniform(kw, (fan_in, fan_out), jnp.float32, -bound, bound)
            b = jax.random.uniform(kb, (1, fan_out), jnp.float32, -bound, bound)
            return w.astype(jnp.bfloat16), b

        key, k1, k3 = jax.random.split(key, 3)
        self.w1, self.b1 = _linear_init(k1, feature_dim, hidden_dim)   # fc1
        self.w3, self.b3 = _linear_init(k3, hidden_dim, out_dim)       # fc3
        # LayerNorm default init: weight = 1, bias = 0 (f32)
        self.g1 = jnp.ones((1, hidden_dim), jnp.float32)
        self.be1 = jnp.zeros((1, hidden_dim), jnp.float32)
        # Note: fc2 / ln2 exist in the PyTorch module but are unused in forward.

    def __call__(self, x):
        lead_shape = x.shape[:-1]
        x2d = x.reshape(-1, self.feature_dim)
        m = x2d.shape[0]
        # Bucket tm to a multiple of 8 (static jit arg -> bounded recompiles).
        # No host-side padding: Pallas block padding covers the partial tile.
        tm = min(_TM_MAX, ((m + 7) // 8) * 8)
        out = _layernorm_net_pallas(
            x2d, self.w1, self.b1, self.g1, self.be1, self.w3, self.b3, tm=tm)
        return out.reshape(*lead_shape, self.out_dim)


if __name__ == "__main__":
    key = jax.random.PRNGKey(0)
    key, xk, pk = jax.random.split(key, 3)

    batch = 8
    feature_dim = 320       # facebook/esm2_t6_8M_UR50D
    hidden_dim = 512
    out_dim = 256

    x = jax.random.normal(xk, (batch, feature_dim), jnp.float32)
    model = LayerNormNetPallas(feature_dim, hidden_dim, out_dim, pk)

    out = jax.block_until_ready(model(x))
    assert out.shape == (batch, out_dim), out.shape
    assert out.dtype == jnp.float32, out.dtype

    # Pure-JAX f32 reference of the same forward (dropout = identity in eval).
    # Tolerance is loosened vs the previous f32 kernel because the Pallas
    # kernel now feeds the MXU bf16 operands (f32 accumulation is kept).
    w1f, w3f = model.w1.astype(jnp.float32), model.w3.astype(jnp.float32)
    h = x @ w1f + model.b1
    mean = h.mean(-1, keepdims=True)
    var = ((h - mean) ** 2).mean(-1, keepdims=True)
    h = (h - mean) * jax.lax.rsqrt(var + _LN_EPS) * model.g1 + model.be1
    h = jnp.maximum(h, 0.0)
    ref = h @ w3f + model.b3

    assert bool(jnp.allclose(out, ref, atol=5e-2, rtol=5e-2)), (
        "Pallas output mismatch vs reference")

    print("KERNEL_OK")
</pallas_src>

<mosaic_0001>
module attributes {stable_mosaic.version = 11 : i64} {
  func.func @_layernorm_net_kernel(%arg0: i32, %arg1: memref<8x320xf32, #tpu.memory_space<vmem>>, %arg2: memref<320x512xbf16, #tpu.memory_space<vmem>>, %arg3: memref<1x512xf32, #tpu.memory_space<vmem>>, %arg4: memref<1x512xf32, #tpu.memory_space<vmem>>, %arg5: memref<1x512xf32, #tpu.memory_space<vmem>>, %arg6: memref<512x256xbf16, #tpu.memory_space<vmem>>, %arg7: memref<1x256xf32, #tpu.memory_space<vmem>>, %arg8: memref<8x256xf32, #tpu.memory_space<vmem>>) attributes {dimension_semantics = [#tpu.dimension_semantics<parallel>], iteration_bounds = array<i64: 1>, scalar_prefetch = 0 : i64, scratch_operands = 0 : i64, tpu.core_type = #tpu.core_type<tc>, window_params = [{transform_indices = @transform_0, window_bounds = array<i64: 8, 320>}, {pipeline_mode = #tpu.pipeline_mode<synchronous>, transform_indices = @transform_1, window_bounds = array<i64: 320, 512>}, {pipeline_mode = #tpu.pipeline_mode<synchronous>, transform_indices = @transform_2, window_bounds = array<i64: 1, 512>}, {pipeline_mode = #tpu.pipeline_mode<synchronous>, transform_indices = @transform_3, window_bounds = array<i64: 1, 512>}, {pipeline_mode = #tpu.pipeline_mode<synchronous>, transform_indices = @transform_4, window_bounds = array<i64: 1, 512>}, {pipeline_mode = #tpu.pipeline_mode<synchronous>, transform_indices = @transform_5, window_bounds = array<i64: 512, 256>}, {pipeline_mode = #tpu.pipeline_mode<synchronous>, transform_indices = @transform_6, window_bounds = array<i64: 1, 256>}, {transform_indices = @transform_7, window_bounds = array<i64: 8, 256>}]} {
    %c0 = arith.constant 0 : index
    %c0_0 = arith.constant 0 : index
    %0 = vector.load %arg1[%c0, %c0_0] : memref<8x320xf32, #tpu.memory_space<vmem>>, vector<8x320xf32>
    %1 = arith.truncf %0 : vector<8x320xf32> to vector<8x320xbf16>
    %c0_1 = arith.constant 0 : index
    %c0_2 = arith.constant 0 : index
    %2 = vector.load %arg2[%c0_1, %c0_2] : memref<320x512xbf16, #tpu.memory_space<vmem>>, vector<320x512xbf16>
    %cst = arith.constant dense<0.000000e+00> : vector<8x512xf32>
    %3 = tpu.matmul %1, %2, %cst {dimension_numbers = #tpu.dot_dimension_numbers<[1], [0], [0], [1], [0, 0, 1, 1], [], []>} : vector<8x320xbf16>, vector<320x512xbf16>, vector<8x512xf32> -> vector<8x512xf32>
    %c0_3 = arith.constant 0 : index
    %c0_4 = arith.constant 0 : index
    %4 = vector.load %arg3[%c0_3, %c0_4] : memref<1x512xf32, #tpu.memory_space<vmem>>, vector<1x512xf32>
    %5 = vector.broadcast %4 : vector<1x512xf32> to vector<8x512xf32>
    %6 = arith.addf %3, %5 : vector<8x512xf32>
    %cst_5 = arith.constant dense<0.000000e+00> : vector<8xf32>
    %7 = vector.multi_reduction <add>, %6, %cst_5 [1] : vector<8x512xf32> to vector<8xf32>
    %8 = vector.shape_cast %7 : vector<8xf32> to vector<8x1xf32>
    %9 = arith.mulf %6, %6 : vector<8x512xf32>
    %cst_6 = arith.constant dense<0.000000e+00> : vector<8xf32>
    %10 = vector.multi_reduction <add>, %9, %cst_6 [1] : vector<8x512xf32> to vector<8xf32>
    %11 = vector.shape_cast %10 : vector<8xf32> to vector<8x1xf32>
    %cst_7 = arith.constant 0.001953125 : f32
    %12 = vector.broadcast %cst_7 : f32 to vector<8x1xf32>
    %13 = arith.mulf %8, %12 : vector<8x1xf32>
    %cst_8 = arith.constant 0.001953125 : f32
    %14 = vector.broadcast %cst_8 : f32 to vector<8x1xf32>
    %15 = arith.mulf %11, %14 : vector<8x1xf32>
    %16 = arith.mulf %13, %13 : vector<8x1xf32>
    %17 = arith.subf %15, %16 : vector<8x1xf32>
    %18 = vector.broadcast %13 : vector<8x1xf32> to vector<8x512xf32>
    %19 = arith.subf %6, %18 : vector<8x512xf32>
    %cst_9 = arith.constant 9.99999974E-6 : f32
    %20 = vector.broadcast %cst_9 : f32 to vector<8x1xf32>
    %21 = arith.addf %17, %20 : vector<8x1xf32>
    %22 = math.rsqrt %21 : vector<8x1xf32>
    %23 = vector.broadcast %22 : vector<8x1xf32> to vector<8x512xf32>
    %24 = arith.mulf %19, %23 : vector<8x512xf32>
    %c0_10 = arith.constant 0 : index
    %c0_11 = arith.constant 0 : index
    %25 = vector.load %arg4[%c0_10, %c0_11] : memref<1x512xf32, #tpu.memory_space<vmem>>, vector<1x512xf32>
    %26 = vector.broadcast %25 : vector<1x512xf32> to vector<8x512xf32>
    %27 = arith.mulf %24, %26 : vector<8x512xf32>
    %c0_12 = arith.constant 0 : index
    %c0_13 = arith.constant 0 : index
    %28 = vector.load %arg5[%c0_12, %c0_13] : memref<1x512xf32, #tpu.memory_space<vmem>>, vector<1x512xf32>
    %29 = vector.broadcast %28 : vector<1x512xf32> to vector<8x512xf32>
    %30 = arith.addf %27, %29 : vector<8x512xf32>
    %cst_14 = arith.constant 0.000000e+00 : f32
    %31 = vector.broadcast %cst_14 : f32 to vector<8x512xf32>
    %32 = arith.maximumf %30, %31 : vector<8x512xf32>
    %33 = arith.truncf %32 : vector<8x512xf32> to vector<8x512xbf16>
    %c0_15 = arith.constant 0 : index
    %c0_16 = arith.constant 0 : index
    %34 = vector.load %arg6[%c0_15, %c0_16] : memref<512x256xbf16, #tpu.memory_space<vmem>>, vector<512x256xbf16>
    %cst_17 = arith.constant dense<0.000000e+00> : vector<8x256xf32>
    %35 = tpu.matmul %33, %34, %cst_17 {dimension_numbers = #tpu.dot_dimension_numbers<[1], [0], [0], [1], [0, 0, 1, 1], [], []>} : vector<8x512xbf16>, vector<512x256xbf16>, vector<8x256xf32> -> vector<8x256xf32>
    %c0_18 = arith.constant 0 : index
    %c0_19 = arith.constant 0 : index
    %36 = vector.load %arg7[%c0_18, %c0_19] : memref<1x256xf32, #tpu.memory_space<vmem>>, vector<1x256xf32>
    %37 = vector.broadcast %36 : vector<1x256xf32> to vector<8x256xf32>
    %38 = arith.addf %35, %37 : vector<8x256xf32>
    %c0_20 = arith.constant 0 : index
    %c0_21 = arith.constant 0 : index
    %39 = vector.load %arg8[%c0_20, %c0_21] : memref<8x256xf32, #tpu.memory_space<vmem>>, vector<8x256xf32>
    tpu.vector_store %arg8[%c0_20, %c0_21], %38 {strides = array<i32>} : memref<8x256xf32, #tpu.memory_space<vmem>>, vector<8x256xf32>,
    return
  }
  func.func @transform_0(%arg0: i32) -> (i32, i32) {
    %c0_i32 = arith.constant 0 : i32
    %c0_i32_0 = arith.constant 0 : i32
    return %arg0, %c0_i32 : i32, i32
  }
  func.func @transform_1(%arg0: i32) -> (i32, i32) {
    %c0_i32 = arith.constant 0 : i32
    %c0_i32_0 = arith.constant 0 : i32
    %c0_i32_1 = arith.constant 0 : i32
    return %c0_i32, %c0_i32_0 : i32, i32
  }
  func.func @transform_2(%arg0: i32) -> (i32, i32) {
    %c0_i32 = arith.constant 0 : i32
    %c0_i32_0 = arith.constant 0 : i32
    %c0_i32_1 = arith.constant 0 : i32
    return %c0_i32, %c0_i32_0 : i32, i32
  }
  func.func @transform_3(%arg0: i32) -> (i32, i32) {
    %c0_i32 = arith.constant 0 : i32
    %c0_i32_0 = arith.constant 0 : i32
    %c0_i32_1 = arith.constant 0 : i32
    return %c0_i32, %c0_i32_0 : i32, i32
  }
  func.func @transform_4(%arg0: i32) -> (i32, i32) {
    %c0_i32 = arith.constant 0 : i32
    %c0_i32_0 = arith.constant 0 : i32
    %c0_i32_1 = arith.constant 0 : i32
    return %c0_i32, %c0_i32_0 : i32, i32
  }
  func.func @transform_5(%arg0: i32) -> (i32, i32) {
    %c0_i32 = arith.constant 0 : i32
    %c0_i32_0 = arith.constant 0 : i32
    %c0_i32_1 = arith.constant 0 : i32
    return %c0_i32, %c0_i32_0 : i32, i32
  }
  func.func @transform_6(%arg0: i32) -> (i32, i32) {
    %c0_i32 = arith.constant 0 : i32
    %c0_i32_0 = arith.constant 0 : i32
    %c0_i32_1 = arith.constant 0 : i32
    return %c0_i32, %c0_i32_0 : i32, i32
  }
  func.func @transform_7(%arg0: i32) -> (i32, i32) {
    %c0_i32 = arith.constant 0 : i32
    %c0_i32_0 = arith.constant 0 : i32
    return %arg0, %c0_i32 : i32, i32
  }
}

</mosaic_0001>

<llo_original>
// kernel: _layernorm_net_pallas.1
$region0: #{_layernorm_net_pallas.1}
  #allocation0 [shape = 'u32[]', space=smem, size = 0x4, offset = 0x4, fixed_abs, tag = 'smem constant byte address 0x4 - core index']
  #allocation1 [shape = 'u32[144,128]{1,0:T(1,128)}', space=vmem, size = 0x12000, scoped, tag = 'internal scratch']
  %s0 = inlined_call_operand.hbm [shape: f32[8,320], index: 0, kind: input, shape index: {}]
  %s1 = inlined_call_operand.hbm [shape: bf16[320,512], index: 1, kind: input, shape index: {}]
  %s2 = inlined_call_operand.hbm [shape: f32[1,512], index: 2, kind: input, shape index: {}]
  %s3 = inlined_call_operand.vmem [shape: f32[1,512], index: 3, kind: input, shape index: {}]
  %s4 = inlined_call_operand.hbm [shape: f32[1,512], index: 4, kind: input, shape index: {}]
  %s5 = inlined_call_operand.hbm [shape: bf16[512,256], index: 5, kind: input, shape index: {}]
  %s6 = inlined_call_operand.vmem [shape: f32[1,256], index: 6, kind: input, shape index: {}]
  %s7 = inlined_call_operand.hbm [shape: f32[8,256], index: 7, kind: output, shape index: {}]
  %s8 = sld [smem:[#allocation0]]
  $region58: #{_layernorm_net_pallas.1} parent=0
    _
  %s10 = ssub.s32 1, %s8
  %s11 = scalar_select 0, %s10, %s8
  $region1: #{_layernorm_net_pallas.1} parent=0
    #allocation2 [shape = 'u8[12288]{0}', space=vmem, size = 0x3000, scoped, tag = 'input window, operand 0, single buffered']
    #allocation3 [shape = 's32[1]{0}', space=sflag, size = 0x4, scoped, tag = 'scoped memory for _layernorm_net_pallas.1']
    #allocation4 [shape = 's32[1]{0}', space=sflag, size = 0x4, scoped, tag = 'scoped memory for _layernorm_net_pallas.1']
    #allocation5 [shape = 'u8[327680]{0}', space=vmem, size = 0x50000, scoped, tag = 'input window, operand 1, single buffered']
    #allocation6 [shape = 's32[1]{0}', space=sflag, size = 0x4, scoped, tag = 'scoped memory for _layernorm_net_pallas.1']
    #allocation7 [shape = 'u8[2048]{0}', space=vmem, size = 0x800, scoped, tag = 'input window, operand 2, single buffered']
    #allocation8 [shape = 'u8[2048]{0}', space=vmem, size = 0x800, scoped, tag = 'input window, operand 4, single buffered']
    #allocation9 [shape = 's32[1]{0}', space=sflag, size = 0x4, scoped, tag = 'scoped memory for _layernorm_net_pallas.1']
    #allocation10 [shape = 'u8[262144]{0}', space=vmem, size = 0x40000, scoped, tag = 'input window, operand 5, single buffered']
    #allocation11 [shape = 'u8[8192]{0}', space=vmem, size = 0x2000, scoped, tag = 'output window, operand 0, single buffered']
    %12 = vsyncpa [#allocation3], 0
    %13 = vsyncpa [#allocation6], 0
    %14 = vsyncpa [#allocation9], 0
    %15 = vsyncpa [#allocation4], 0
    // Predicated region
    $region2: #{_layernorm_net_pallas.1} parent=1 // pred_check
      _
    $region3: #{_layernorm_net_pallas.1} parent=1 // pred_check_branch
      %17 = sbr.rel (0) target = $region5
    $region4: #{_layernorm_net_pallas.1} parent=1 // pred_region
      %s19 = ssub.s32 384, 384
      %20 = vsyncadd [#allocation3], %s19
      %s22 = sshll.u32 [#allocation2], 4
      %s23 = int_to_ptr.vmem [resolvable:$true] %s22
      %25 = dma.hbm_to_vmem [thread:$0]  %s0, 384, %s23, [#allocation3]
    $region5: #{_layernorm_net_pallas.1} parent=1 // pred_fallthru
      _
    // Predicated region
    $region6: #{_layernorm_net_pallas.1} parent=1 // pred_check
      _
    $region7: #{_layernorm_net_pallas.1} parent=1 // pred_check_branch
      %27 = sbr.rel (0) target = $region9
    $region8: #{_layernorm_net_pallas.1} parent=1 // pred_region
      %s29 = ssub.s32 10240, 10240
      %30 = vsyncadd [#allocation6], %s29
      %s31 = sshll.u32 [#allocation5], 4
      %s32 = int_to_ptr.vmem [resolvable:$true] %s31
      %37 = dma.hbm_to_vmem [thread:$0]  %s1, 10240, %s32, [#allocation6], 256, 256, 16
    $region9: #{_layernorm_net_pallas.1} parent=1 // pred_fallthru
      _
    // Predicated region
    $region10: #{_layernorm_net_pallas.1} parent=1 // pred_check
      _
    $region11: #{_layernorm_net_pallas.1} parent=1 // pred_check_branch
      %39 = sbr.rel (0) target = $region13
    $region12: #{_layernorm_net_pallas.1} parent=1 // pred_region
      %s41 = ssub.s32 64, 64
      %42 = vsyncadd [#allocation6], %s41
      %s44 = sshll.u32 [#allocation7], 4
      %s45 = int_to_ptr.vmem [resolvable:$true] %s44
      %47 = dma.hbm_to_vmem [thread:$0]  %s2, 64, %s45, [#allocation6]
    $region13: #{_layernorm_net_pallas.1} parent=1 // pred_fallthru
      _
    // Predicated region
    $region14: #{_layernorm_net_pallas.1} parent=1 // pred_check
      _
    $region15: #{_layernorm_net_pallas.1} parent=1 // pred_check_branch
      %49 = sbr.rel (0) target = $region17
    $region16: #{_layernorm_net_pallas.1} parent=1 // pred_region
      _
    $region17: #{_layernorm_net_pallas.1} parent=1 // pred_fallthru
      _
    // Predicated region
    $region18: #{_layernorm_net_pallas.1} parent=1 // pred_check
      _
    $region19: #{_layernorm_net_pallas.1} parent=1 // pred_check_branch
      %51 = sbr.rel (0) target = $region21
    $region20: #{_layernorm_net_pallas.1} parent=1 // pred_region
      %s53 = ssub.s32 64, 64
      %54 = vsyncadd [#allocation9], %s53
      %s56 = sshll.u32 [#allocation8], 4
      %s57 = int_to_ptr.vmem [resolvable:$true] %s56
      %59 = dma.hbm_to_vmem [thread:$0]  %s4, 64, %s57, [#allocation9]
    $region21: #{_layernorm_net_pallas.1} parent=1 // pred_fallthru
      _
    // Predicated region
    $region22: #{_layernorm_net_pallas.1} parent=1 // pred_check
      _
    $region23: #{_layernorm_net_pallas.1} parent=1 // pred_check_branch
      %61 = sbr.rel (0) target = $region25
    $region24: #{_layernorm_net_pallas.1} parent=1 // pred_region
      %s63 = ssub.s32 8192, 8192
      %64 = vsyncadd [#allocation9], %s63
      %s65 = sshll.u32 [#allocation10], 4
      %s66 = int_to_ptr.vmem [resolvable:$true] %s65
      %71 = dma.hbm_to_vmem [thread:$0]  %s5, 8192, %s66, [#allocation9], 128, 128, 8
    $region25: #{_layernorm_net_pallas.1} parent=1 // pred_fallthru
      _
    // Predicated region
    $region26: #{_layernorm_net_pallas.1} parent=1 // pred_check
      _
    $region27: #{_layernorm_net_pallas.1} parent=1 // pred_check_branch
      %73 = sbr.rel (0) target = $region29
    $region28: #{_layernorm_net_pallas.1} parent=1 // pred_region
      _
    $region29: #{_layernorm_net_pallas.1} parent=1 // pred_fallthru
      _
    // Predicated region
    $region30: #{_layernorm_net_pallas.1} parent=1 // pred_check
      _
    $region31: #{_layernorm_net_pallas.1} parent=1 // pred_check_branch
      %75 = sbr.rel (0) target = $region33
    $region32: #{_layernorm_net_pallas.1} parent=1 // pred_region
      %76 = dma.done [#allocation3], 384
    $region33: #{_layernorm_net_pallas.1} parent=1 // pred_fallthru
      _
    // Predicated region
    $region34: #{_layernorm_net_pallas.1} parent=1 // pred_check
      _
    $region35: #{_layernorm_net_pallas.1} parent=1 // pred_check_branch
      %78 = sbr.rel (0) target = $region37
    $region36: #{_layernorm_net_pallas.1} parent=1 // pred_region
      %79 = dma.done [#allocation6], 10240
    $region37: #{_layernorm_net_pallas.1} parent=1 // pred_fallthru
      _
    // Predicated region
    $region38: #{_layernorm_net_pallas.1} parent=1 // pred_check
      _
    $region39: #{_layernorm_net_pallas.1} parent=1 // pred_check_branch
      %81 = sbr.rel (0) target = $region41
    $region40: #{_layernorm_net_pallas.1} parent=1 // pred_region
      %82 = dma.done [#allocation6], 64
    $region41: #{_layernorm_net_pallas.1} parent=1 // pred_fallthru
      _
    // Predicated region
    $region42: #{_layernorm_net_pallas.1} parent=1 // pred_check
      _
    $region43: #{_layernorm_net_pallas.1} parent=1 // pred_check_branch
      %84 = sbr.rel (0) target = $region45
    $region44: #{_layernorm_net_pallas.1} parent=1 // pred_region
      %85 = dma.done [#allocation9], 64
    $region45: #{_layernorm_net_pallas.1} parent=1 // pred_fallthru
      _
    // Predicated region
    $region46: #{_layernorm_net_pallas.1} parent=1 // pred_check
      _
    $region47: #{_layernorm_net_pallas.1} parent=1 // pred_check_branch
      %87 = sbr.rel (0) target = $region49
    $region48: #{_layernorm_net_pallas.1} parent=1 // pred_region
      %88 = dma.done [#allocation9], 8192
    $region49: #{_layernorm_net_pallas.1} parent=1 // pred_fallthru
      _
    %v90 = vld [vmem:[#allocation2] sm:$0xff]
    %v91 = vld [vmem:[#allocation2 + $0x8] sm:$0xff]
    %v92 = vld [vmem:[#allocation2 + $0x10] sm:$0xff]
    %v93 = vpack.c.bf16 %v90, %v90
    %v94 = vpack.c.bf16 %v91, %v91
    %v95 = vpack.c.bf16 %v92, %v92
    %v96 = vld [vmem:[#allocation5] sm:$0xff]
    %v97 = vld [vmem:[#allocation5 + $0x8] sm:$0xff]
    %v98 = vld [vmem:[#allocation5 + $0x10] sm:$0xff]
    %v99 = vld [vmem:[#allocation5 + $0x18] sm:$0xff]
    %v100 = vld [vmem:[#allocation5 + $0x20] sm:$0xff]
    %v101 = vld [vmem:[#allocation5 + $0x28] sm:$0xff]
    %v102 = vld [vmem:[#allocation5 + $0x30] sm:$0xff]
    %v103 = vld [vmem:[#allocation5 + $0x38] sm:$0xff]
    %v104 = vld [vmem:[#allocation5 + $0x40] sm:$0xff]
    %v105 = vld [vmem:[#allocation5 + $0x48] sm:$0xff]
    %v106 = vld [vmem:[#allocation5 + $0x50] sm:$0xff]
    %v107 = vld [vmem:[#allocation5 + $0x58] sm:$0xff]
    %v108 = vld [vmem:[#allocation5 + $0x60] sm:$0xff]
    %v109 = vld [vmem:[#allocation5 + $0x68] sm:$0xff]
    %v110 = vld [vmem:[#allocation5 + $0x70] sm:$0xff]
    %v111 = vld [vmem:[#allocation5 + $0x78] sm:$0xff]
    %v112 = vld [vmem:[#allocation5 + $0x80] sm:$0xff]
    %v113 = vld [vmem:[#allocation5 + $0x88] sm:$0xff]
    %v114 = vld [vmem:[#allocation5 + $0x90] sm:$0xff]
    %v115 = vld [vmem:[#allocation5 + $0x98] sm:$0xff]
    %v116 = vld [vmem:[#allocation5 + $0xa0] sm:$0xff]
    %v117 = vld [vmem:[#allocation5 + $0xa8] sm:$0xff]
    %v118 = vld [vmem:[#allocation5 + $0xb0] sm:$0xff]
    %v119 = vld [vmem:[#allocation5 + $0xb8] sm:$0xff]
    %v120 = vld [vmem:[#allocation5 + $0xc0] sm:$0xff]
    %v121 = vld [vmem:[#allocation5 + $0xc8] sm:$0xff]
    %v122 = vld [vmem:[#allocation5 + $0xd0] sm:$0xff]
    %v123 = vld [vmem:[#allocation5 + $0xd8] sm:$0xff]
    %v124 = vld [vmem:[#allocation5 + $0xe0] sm:$0xff]
    %v125 = vld [vmem:[#allocation5 + $0xe8] sm:$0xff]
    %v126 = vld [vmem:[#allocation5 + $0xf0] sm:$0xff]
    %v127 = vld [vmem:[#allocation5 + $0xf8] sm:$0xff]
    %v128 = vld [vmem:[#allocation5 + $0x100] sm:$0xff]
    %v129 = vld [vmem:[#allocation5 + $0x108] sm:$0xff]
    %v130 = vld [vmem:[#allocation5 + $0x110] sm:$0xff]
    %v131 = vld [vmem:[#allocation5 + $0x118] sm:$0xff]
    %v132 = vld [vmem:[#allocation5 + $0x120] sm:$0xff]
    %v133 = vld [vmem:[#allocation5 + $0x128] sm:$0xff]
    %v134 = vld [vmem:[#allocation5 + $0x130] sm:$0xff]
    %v135 = vld [vmem:[#allocation5 + $0x138] sm:$0xff]
    %v136 = vld [vmem:[#allocation5 + $0x140] sm:$0xff]
    %v137 = vld [vmem:[#allocation5 + $0x148] sm:$0xff]
    %v138 = vld [vmem:[#allocation5 + $0x150] sm:$0xff]
    %v139 = vld [vmem:[#allocation5 + $0x158] sm:$0xff]
    %v140 = vld [vmem:[#allocation5 + $0x160] sm:$0xff]
    %v141 = vld [vmem:[#allocation5 + $0x168] sm:$0xff]
    %v142 = vld [vmem:[#allocation5 + $0x170] sm:$0xff]
    %v143 = vld [vmem:[#allocation5 + $0x178] sm:$0xff]
    %v144 = vld [vmem:[#allocation5 + $0x180] sm:$0xff]
    %v145 = vld [vmem:[#allocation5 + $0x188] sm:$0xff]
    %v146 = vld [vmem:[#allocation5 + $0x190] sm:$0xff]
    %v147 = vld [vmem:[#allocation5 + $0x198] sm:$0xff]
    %v148 = vld [vmem:[#allocation5 + $0x1a0] sm:$0xff]
    %v149 = vld [vmem:[#allocation5 + $0x1a8] sm:$0xff]
    %v150 = vld [vmem:[#allocation5 + $0x1b0] sm:$0xff]
    %v151 = vld [vmem:[#allocation5 + $0x1b8] sm:$0xff]
    %v152 = vld [vmem:[#allocation5 + $0x1c0] sm:$0xff]
    %v153 = vld [vmem:[#allocation5 + $0x1c8] sm:$0xff]
    %v154 = vld [vmem:[#allocation5 + $0x1d0] sm:$0xff]
    %v155 = vld [vmem:[#allocation5 + $0x1d8] sm:$0xff]
    %v156 = vld [vmem:[#allocation5 + $0x1e0] sm:$0xff]
    %v157 = vld [vmem:[#allocation5 + $0x1e8] sm:$0xff]
    %v158 = vld [vmem:[#allocation5 + $0x1f0] sm:$0xff]
    %v159 = vld [vmem:[#allocation5 + $0x1f8] sm:$0xff]
    %v160 = vld [vmem:[#allocation5 + $0x200] sm:$0xff]
    %v161 = vld [vmem:[#allocation5 + $0x208] sm:$0xff]
    %v162 = vld [vmem:[#allocation5 + $0x210] sm:$0xff]
    %v163 = vld [vmem:[#allocation5 + $0x218] sm:$0xff]
    %v164 = vld [vmem:[#allocation5 + $0x220] sm:$0xff]
    %v165 = vld [vmem:[#allocation5 + $0x228] sm:$0xff]
    %v166 = vld [vmem:[#allocation5 + $0x230] sm:$0xff]
    %v167 = vld [vmem:[#allocation5 + $0x238] sm:$0xff]
    %v168 = vld [vmem:[#allocation5 + $0x240] sm:$0xff]
    %v169 = vld [vmem:[#allocation5 + $0x248] sm:$0xff]
    %v170 = vld [vmem:[#allocation5 + $0x250] sm:$0xff]
    %v171 = vld [vmem:[#allocation5 + $0x258] sm:$0xff]
    %v172 = vld [vmem:[#allocation5 + $0x260] sm:$0xff]
    %v173 = vld [vmem:[#allocation5 + $0x268] sm:$0xff]
    %v174 = vld [vmem:[#allocation5 + $0x270] sm:$0xff]
    %v175 = vld [vmem:[#allocation5 + $0x278] sm:$0xff]
    %v176 = vld [vmem:[#allocation7] sm:$0xf]
    %v178 = vlaneseq
    %v179 = vshrl.u32 %v178, 7
    %v180 = vsub.s32 0, %v179
    %v181 = vrot.slane %v176, %v180
    %v182 = vlaneseq
    %v183 = vshrl.u32 %v182, 7
    %v184 = vsub.s32 1, %v183
    %v185 = vrot.slane %v176, %v184
    %v186 = vlaneseq
    %v187 = vshrl.u32 %v186, 7
    %v188 = vsub.s32 2, %v187
    %v189 = vrot.slane %v176, %v188
    %v190 = vlaneseq
    %v191 = vshrl.u32 %v190, 7
    %v192 = vsub.s32 3, %v191
    %v193 = vrot.slane %v176, %v192
    %v278 = vunpack.c.l.b16 %v96
    %v279 = vunpack.c.h.b16 %v96
    %v280 = vunpack.c.l.b16 %v97
    %v281 = vunpack.c.h.b16 %v97
    %v282 = vunpack.c.l.b16 %v98
    %v283 = vunpack.c.h.b16 %v98
    %v284 = vunpack.c.l.b16 %v99
    %v285 = vunpack.c.h.b16 %v99
    %v286 = vunpack.c.l.b16 %v100
    %v287 = vunpack.c.h.b16 %v100
    %v288 = vunpack.c.l.b16 %v101
    %v289 = vunpack.c.h.b16 %v101
    %v290 = vunpack.c.l.b16 %v102
    %v291 = vunpack.c.h.b16 %v102
    %v292 = vunpack.c.l.b16 %v103
    %v293 = vunpack.c.h.b16 %v103
    %v294 = vunpack.c.l.b16 %v104
    %v295 = vunpack.c.h.b16 %v104
    %v296 = vunpack.c.l.b16 %v105
    %v297 = vunpack.c.h.b16 %v105
    %v298 = vunpack.c.l.b16 %v106
    %v299 = vunpack.c.h.b16 %v106
    %v300 = vunpack.c.l.b16 %v107
    %v301 = vunpack.c.h.b16 %v107
    %v302 = vunpack.c.l.b16 %v108
    %v303 = vunpack.c.h.b16 %v108
    %v304 = vunpack.c.l.b16 %v109
    %v305 = vunpack.c.h.b16 %v109
    %v306 = vunpack.c.l.b16 %v110
    %v307 = vunpack.c.h.b16 %v110
    %v308 = vunpack.c.l.b16 %v111
    %v309 = vunpack.c.h.b16 %v111
    %v310 = vunpack.c.l.b16 %v112
    %v311 = vunpack.c.h.b16 %v112
    %v312 = vunpack.c.l.b16 %v113
    %v313 = vunpack.c.h.b16 %v113
    %v314 = vunpack.c.l.b16 %v114
    %v315 = vunpack.c.h.b16 %v114
    %v316 = vunpack.c.l.b16 %v115
    %v317 = vunpack.c.h.b16 %v115
    %v318 = vunpack.c.l.b16 %v116
    %v319 = vunpack.c.h.b16 %v116
    %v320 = vunpack.c.l.b16 %v117
    %v321 = vunpack.c.h.b16 %v117
    %v322 = vunpack.c.l.b16 %v118
    %v323 = vunpack.c.h.b16 %v118
    %v324 = vunpack.c.l.b16 %v119
    %v325 = vunpack.c.h.b16 %v119
    %v326 = vunpack.c.l.b16 %v120
    %v327 = vunpack.c.h.b16 %v120
    %v328 = vunpack.c.l.b16 %v121
    %v329 = vunpack.c.h.b16 %v121
    %v330 = vunpack.c.l.b16 %v122
    %v331 = vunpack.c.h.b16 %v122
    %v332 = vunpack.c.l.b16 %v123
    %v333 = vunpack.c.h.b16 %v123
    %v334 = vunpack.c.l.b16 %v124
    %v335 = vunpack.c.h.b16 %v124
    %v336 = vunpack.c.l.b16 %v125
    %v337 = vunpack.c.h.b16 %v125
    %v338 = vunpack.c.l.b16 %v126
    %v339 = vunpack.c.h.b16 %v126
    %v340 = vunpack.c.l.b16 %v127
    %v341 = vunpack.c.h.b16 %v127
    %v342 = vunpack.c.l.b16 %v128
    %v343 = vunpack.c.h.b16 %v128
    %v344 = vunpack.c.l.b16 %v129
    %v345 = vunpack.c.h.b16 %v129
    %v346 = vunpack.c.l.b16 %v130
    %v347 = vunpack.c.h.b16 %v130
    %v348 = vunpack.c.l.b16 %v131
    %v349 = vunpack.c.h.b16 %v131
    %v350 = vunpack.c.l.b16 %v132
    %v351 = vunpack.c.h.b16 %v132
    %v352 = vunpack.c.l.b16 %v133
    %v353 = vunpack.c.h.b16 %v133
    %v354 = vunpack.c.l.b16 %v134
    %v355 = vunpack.c.h.b16 %v134
    %v356 = vunpack.c.l.b16 %v135
    %v357 = vunpack.c.h.b16 %v135
    %v358 = vunpack.c.l.b16 %v136
    %v359 = vunpack.c.h.b16 %v136
    %v360 = vunpack.c.l.b16 %v137
    %v361 = vunpack.c.h.b16 %v137
    %v362 = vunpack.c.l.b16 %v138
    %v363 = vunpack.c.h.b16 %v138
    %v364 = vunpack.c.l.b16 %v139
    %v365 = vunpack.c.h.b16 %v139
    %v366 = vunpack.c.l.b16 %v140
    %v367 = vunpack.c.h.b16 %v140
    %v368 = vunpack.c.l.b16 %v141
    %v369 = vunpack.c.h.b16 %v141
    %v370 = vunpack.c.l.b16 %v142
    %v371 = vunpack.c.h.b16 %v142
    %v372 = vunpack.c.l.b16 %v143
    %v373 = vunpack.c.h.b16 %v143
    %v374 = vunpack.c.l.b16 %v144
    %v375 = vunpack.c.h.b16 %v144
    %v376 = vunpack.c.l.b16 %v145
    %v377 = vunpack.c.h.b16 %v145
    %v378 = vunpack.c.l.b16 %v146
    %v379 = vunpack.c.h.b16 %v146
    %v380 = vunpack.c.l.b16 %v147
    %v381 = vunpack.c.h.b16 %v147
    %v382 = vunpack.c.l.b16 %v148
    %v383 = vunpack.c.h.b16 %v148
    %v384 = vunpack.c.l.b16 %v149
    %v385 = vunpack.c.h.b16 %v149
    %v386 = vunpack.c.l.b16 %v150
    %v387 = vunpack.c.h.b16 %v150
    %v388 = vunpack.c.l.b16 %v151
    %v389 = vunpack.c.h.b16 %v151
    %v390 = vunpack.c.l.b16 %v152
    %v391 = vunpack.c.h.b16 %v152
    %v392 = vunpack.c.l.b16 %v153
    %v393 = vunpack.c.h.b16 %v153
    %v394 = vunpack.c.l.b16 %v154
    %v395 = vunpack.c.h.b16 %v154
    %v396 = vunpack.c.l.b16 %v155
    %v397 = vunpack.c.h.b16 %v155
    %v398 = vunpack.c.l.b16 %v156
    %v399 = vunpack.c.h.b16 %v156
    %v400 = vunpack.c.l.b16 %v157
    %v401 = vunpack.c.h.b16 %v157
    %v402 = vunpack.c.l.b16 %v158
    %v403 = vunpack.c.h.b16 %v158
    %v404 = vunpack.c.l.b16 %v159
    %v405 = vunpack.c.h.b16 %v159
    %v406 = vunpack.c.l.b16 %v160
    %v407 = vunpack.c.h.b16 %v160
    %v408 = vunpack.c.l.b16 %v161
    %v409 = vunpack.c.h.b16 %v161
    %v410 = vunpack.c.l.b16 %v162
    %v411 = vunpack.c.h.b16 %v162
    %v412 = vunpack.c.l.b16 %v163
    %v413 = vunpack.c.h.b16 %v163
    %v414 = vunpack.c.l.b16 %v164
    %v415 = vunpack.c.h.b16 %v164
    %v416 = vunpack.c.l.b16 %v165
    %v417 = vunpack.c.h.b16 %v165
    %v418 = vunpack.c.l.b16 %v166
    %v419 = vunpack.c.h.b16 %v166
    %v420 = vunpack.c.l.b16 %v167
    %v421 = vunpack.c.h.b16 %v167
    %v422 = vunpack.c.l.b16 %v168
    %v423 = vunpack.c.h.b16 %v168
    %v424 = vunpack.c.l.b16 %v169
    %v425 = vunpack.c.h.b16 %v169
    %v426 = vunpack.c.l.b16 %v170
    %v427 = vunpack.c.h.b16 %v170
    %v428 = vunpack.c.l.b16 %v171
    %v429 = vunpack.c.h.b16 %v171
    %v430 = vunpack.c.l.b16 %v172
    %v431 = vunpack.c.h.b16 %v172
    %v432 = vunpack.c.l.b16 %v173
    %v433 = vunpack.c.h.b16 %v173
    %v434 = vunpack.c.l.b16 %v174
    %v435 = vunpack.c.h.b16 %v174
    %v436 = vunpack.c.l.b16 %v175
    %v437 = vunpack.c.h.b16 %v175
    %v438 = vpack.c.b16 %v282, %v278
    %v439 = vpack.c.b16 %v283, %v279
    %v440 = vpack.c.b16 %v284, %v280
    %v441 = vpack.c.b16 %v285, %v281
    %v442 = vpack.c.b16 %v290, %v286
    %v443 = vpack.c.b16 %v291, %v287
    %v444 = vpack.c.b16 %v292, %v288
    %v445 = vpack.c.b16 %v293, %v289
    %v446 = vpack.c.b16 %v298, %v294
    %v447 = vpack.c.b16 %v299, %v295
    %v448 = vpack.c.b16 %v300, %v296
    %v449 = vpack.c.b16 %v301, %v297
    %v450 = vpack.c.b16 %v306, %v302
    %v451 = vpack.c.b16 %v307, %v303
    %v452 = vpack.c.b16 %v308, %v304
    %v453 = vpack.c.b16 %v309, %v305
    %v454 = vpack.c.b16 %v314, %v310
    %v455 = vpack.c.b16 %v315, %v311
    %v456 = vpack.c.b16 %v316, %v312
    %v457 = vpack.c.b16 %v317, %v313
    %v458 = vpack.c.b16 %v322, %v318
    %v459 = vpack.c.b16 %v323, %v319
    %v460 = vpack.c.b16 %v324, %v320
    %v461 = vpack.c.b16 %v325, %v321
    %v462 = vpack.c.b16 %v330, %v326
    %v463 = vpack.c.b16 %v331, %v327
    %v464 = vpack.c.b16 %v332, %v328
    %v465 = vpack.c.b16 %v333, %v329
    %v466 = vpack.c.b16 %v338, %v334
    %v467 = vpack.c.b16 %v339, %v335
    %v468 = vpack.c.b16 %v340, %v336
    %v469 = vpack.c.b16 %v341, %v337
    %v470 = vpack.c.b16 %v346, %v342
    %v471 = vpack.c.b16 %v347, %v343
    %v472 = vpack.c.b16 %v348, %v344
    %v473 = vpack.c.b16 %v349, %v345
    %v474 = vpack.c.b16 %v354, %v350
    %v475 = vpack.c.b16 %v355, %v351
    %v476 = vpack.c.b16 %v356, %v352
    %v477 = vpack.c.b16 %v357, %v353
    %v478 = vpack.c.b16 %v362, %v358
    %v479 = vpack.c.b16 %v363, %v359
    %v480 = vpack.c.b16 %v364, %v360
    %v481 = vpack.c.b16 %v365, %v361
    %v482 = vpack.c.b16 %v370, %v366
    %v483 = vpack.c.b16 %v371, %v367
    %v484 = vpack.c.b16 %v372, %v368
    %v485 = vpack.c.b16 %v373, %v369
    %v486 = vpack.c.b16 %v378, %v374
    %v487 = vpack.c.b16 %v379, %v375
    %v488 = vpack.c.b16 %v380, %v376
    %v489 = vpack.c.b16 %v381, %v377
    %v490 = vpack.c.b16 %v386, %v382
    %v491 = vpack.c.b16 %v387, %v383
    %v492 = vpack.c.b16 %v388, %v384
    %v493 = vpack.c.b16 %v389, %v385
    %v494 = vpack.c.b16 %v394, %v390
    %v495 = vpack.c.b16 %v395, %v391
    %v496 = vpack.c.b16 %v396, %v392
    %v497 = vpack.c.b16 %v397, %v393
    %v498 = vpack.c.b16 %v402, %v398
    %v499 = vpack.c.b16 %v403, %v399
    %v500 = vpack.c.b16 %v404, %v400
    %v501 = vpack.c.b16 %v405, %v401
    %v502 = vpack.c.b16 %v410, %v406
    %v503 = vpack.c.b16 %v411, %v407
    %v504 = vpack.c.b16 %v412, %v408
    %v505 = vpack.c.b16 %v413, %v409
    %v506 = vpack.c.b16 %v418, %v414
    %v507 = vpack.c.b16 %v419, %v415
    %v508 = vpack.c.b16 %v420, %v416
    %v509 = vpack.c.b16 %v421, %v417
    %v510 = vpack.c.b16 %v426, %v422
    %v511 = vpack.c.b16 %v427, %v423
    %v512 = vpack.c.b16 %v428, %v424
    %v513 = vpack.c.b16 %v429, %v425
    %v514 = vpack.c.b16 %v434, %v430
    %v515 = vpack.c.b16 %v435, %v431
    %v516 = vpack.c.b16 %v436, %v432
    %v517 = vpack.c.b16 %v437, %v433
    %vm598 = vcmask 523264
    %v600 = vsel %vm598, %v95, 0
    %602 = vmatprep.subr.bf16.mxu0 %v467
    %603 = vmatpush1.bf16.msra.mxu0 %v466
    %604 = vmatprep.subr.bf16.mxu0 %v463
    %605 = vmatpush1.bf16.msra.mxu0 %v462
    %606 = vmatprep.subr.bf16.mxu0 %v459
    %607 = vmatpush1.bf16.msra.mxu0 %v458
    %608 = vmatprep.subr.bf16.mxu0 %v455
    %609 = vmatpush1.bf16.msra.mxu0 %v454
    %610 = vmatprep.subr.bf16.mxu0 %v451
    %611 = vmatpush1.bf16.msra.mxu0 %v450
    %612 = vmatprep.subr.bf16.mxu0 %v447
    %613 = vmatpush1.bf16.msra.mxu0 %v446
    %614 = vmatprep.subr.bf16.mxu0 %v443
    %615 = vmatpush1.bf16.msra.mxu0 %v442
    %616 = vmatprep.subr.bf16.mxu0 %v439
    %617 = vmatpush1.bf16.msra.mxu0 %v438
    %618 = vmatprep.subr.bf16.mxu0 %v499
    %619 = vmatpush2.bf16.msra.mxu0 %v498
    %620 = vmatprep.subr.bf16.mxu0 %v495
    %621 = vmatpush2.bf16.msra.mxu0 %v494
    %622 = vmatprep.subr.bf16.mxu0 %v491
    %623 = vmatpush2.bf16.msra.mxu0 %v490
    %624 = vmatprep.subr.bf16.mxu0 %v487
    %625 = vmatpush2.bf16.msra.mxu0 %v486
    %626 = vmatprep.subr.bf16.mxu0 %v483
    %627 = vmatpush2.bf16.msra.mxu0 %v482
    %628 = vmatprep.subr.bf16.mxu0 %v479
    %629 = vmatpush2.bf16.msra.mxu0 %v478
    %630 = vmatprep.subr.bf16.mxu0 %v475
    %631 = vmatpush2.bf16.msra.mxu0 %v474
    %632 = vmatprep.subr.bf16.mxu0 %v471
    %633 = vmatpush2.bf16.msra.mxu0 %v470
    %634 = vmatprep.mubr.bf16.mxu0 %v94
    %635 = vmatmul.mubr.bf16.gmra.mxu0 %v93
    %v636 = vpop.f32.mrf.mxu0
    %v637 = vadd.f32 %v181, %v636
    %v638 = vpop.f32.mrf.mxu0
    %v639 = vadd.f32 %v185, %v638
    %v640 = vpop.f32.mrf.mxu0
    %v641 = vpop.f32.mrf.mxu0
    %642 = vdwg.mxu0
    %643 = vmatprep.subr.bf16.mxu0 0
    %644 = vmatpush1.bf16.msra.mxu0 0
    %645 = vmatprep.subr.bf16.mxu0 0
    %646 = vmatpush1.bf16.msra.mxu0 0
    %647 = vmatprep.subr.bf16.mxu0 0
    %648 = vmatpush1.bf16.msra.mxu0 0
    %649 = vmatprep.subr.bf16.mxu0 0
    %650 = vmatpush1.bf16.msra.mxu0 0
    %651 = vmatprep.subr.bf16.mxu0 %v515
    %652 = vmatpush1.bf16.msra.mxu0 %v514
    %653 = vmatprep.subr.bf16.mxu0 %v511
    %654 = vmatpush1.bf16.msra.mxu0 %v510
    %655 = vmatprep.subr.bf16.mxu0 %v507
    %656 = vmatpush1.bf16.msra.mxu0 %v506
    %657 = vmatprep.subr.bf16.mxu0 %v503
    %658 = vmatpush1.bf16.msra.mxu0 %v502
    %659 = vmatprep.subr.bf16.mxu0 0
    %660 = vmatpush2.bf16.msra.mxu0 0
    %661 = vmatprep.subr.bf16.mxu0 0
    %662 = vmatpush2.bf16.msra.mxu0 0
    %663 = vmatprep.subr.bf16.mxu0 0
    %664 = vmatpush2.bf16.msra.mxu0 0
    %665 = vmatprep.subr.bf16.mxu0 0
    %666 = vmatpush2.bf16.msra.mxu0 0
    %667 = vmatprep.subr.bf16.mxu0 0
    %668 = vmatpush2.bf16.msra.mxu0 0
    %669 = vmatprep.subr.bf16.mxu0 0
    %670 = vmatpush2.bf16.msra.mxu0 0
    %671 = vmatprep.subr.bf16.mxu0 0
    %672 = vmatpush2.bf16.msra.mxu0 0
    %673 = vmatprep.subr.bf16.mxu0 0
    %674 = vmatpush2.bf16.msra.mxu0 0
    %675 = vmatprep.mubr.bf16.mxu0 0
    %676 = vmatmul.mubr.bf16.gmra.mxu0 %v600
    %v677 = vpop.f32.mrf.mxu0
    %v678 = vadd.f32 %v637, %v677
    %v679 = vpop.f32.mrf.mxu0
    %v680 = vadd.f32 %v639, %v679
    %v681 = vpop.f32.mrf.mxu0
    %v682 = vpop.f32.mrf.mxu0
    %683 = vdwg.mxu0
    %684 = vmatprep.subr.bf16.mxu0 %v469
    %685 = vmatpush1.bf16.msra.mxu0 %v468
    %686 = vmatprep.subr.bf16.mxu0 %v465
    %687 = vmatpush1.bf16.msra.mxu0 %v464
    %688 = vmatprep.subr.bf16.mxu0 %v461
    %689 = vmatpush1.bf16.msra.mxu0 %v460
    %690 = vmatprep.subr.bf16.mxu0 %v457
    %691 = vmatpush1.bf16.msra.mxu0 %v456
    %692 = vmatprep.subr.bf16.mxu0 %v453
    %693 = vmatpush1.bf16.msra.mxu0 %v452
    %694 = vmatprep.subr.bf16.mxu0 %v449
    %695 = vmatpush1.bf16.msra.mxu0 %v448
    %696 = vmatprep.subr.bf16.mxu0 %v445
    %697 = vmatpush1.bf16.msra.mxu0 %v444
    %698 = vmatprep.subr.bf16.mxu0 %v441
    %699 = vmatpush1.bf16.msra.mxu0 %v440
    %700 = vmatprep.subr.bf16.mxu0 %v501
    %701 = vmatpush2.bf16.msra.mxu0 %v500
    %702 = vmatprep.subr.bf16.mxu0 %v497
    %703 = vmatpush2.bf16.msra.mxu0 %v496
    %704 = vmatprep.subr.bf16.mxu0 %v493
    %705 = vmatpush2.bf16.msra.mxu0 %v492
    %706 = vmatprep.subr.bf16.mxu0 %v489
    %707 = vmatpush2.bf16.msra.mxu0 %v488
    %708 = vmatprep.subr.bf16.mxu0 %v485
    %709 = vmatpush2.bf16.msra.mxu0 %v484
    %710 = vmatprep.subr.bf16.mxu0 %v481
    %711 = vmatpush2.bf16.msra.mxu0 %v480
    %712 = vmatprep.subr.bf16.mxu0 %v477
    %713 = vmatpush2.bf16.msra.mxu0 %v476
    %714 = vmatprep.subr.bf16.mxu0 %v473
    %715 = vmatpush2.bf16.msra.mxu0 %v472
    %716 = vmatprep.mubr.bf16.mxu0 %v94
    %717 = vmatmul.mubr.bf16.gmra.mxu0 %v93
    %v718 = vpop.f32.mrf.mxu0
    %v719 = vadd.f32 %v189, %v718
    %v720 = vpop.f32.mrf.mxu0
    %v721 = vadd.f32 %v193, %v720
    %v722 = vpop.f32.mrf.mxu0
    %v723 = vpop.f32.mrf.mxu0
    %724 = vdwg.mxu0
    %725 = vmatprep.subr.bf16.mxu0 0
    %726 = vmatpush1.bf16.msra.mxu0 0
    %727 = vmatprep.subr.bf16.mxu0 0
    %728 = vmatpush1.bf16.msra.mxu0 0
    %729 = vmatprep.subr.bf16.mxu0 0
    %730 = vmatpush1.bf16.msra.mxu0 0
    %731 = vmatprep.subr.bf16.mxu0 0
    %732 = vmatpush1.bf16.msra.mxu0 0
    %733 = vmatprep.subr.bf16.mxu0 %v517
    %734 = vmatpush1.bf16.msra.mxu0 %v516
    %735 = vmatprep.subr.bf16.mxu0 %v513
    %736 = vmatpush1.bf16.msra.mxu0 %v512
    %737 = vmatprep.subr.bf16.mxu0 %v509
    %738 = vmatpush1.bf16.msra.mxu0 %v508
    %739 = vmatprep.subr.bf16.mxu0 %v505
    %740 = vmatpush1.bf16.msra.mxu0 %v504
    %741 = vmatprep.subr.bf16.mxu0 0
    %742 = vmatpush2.bf16.msra.mxu0 0
    %743 = vmatprep.subr.bf16.mxu0 0
    %744 = vmatpush2.bf16.msra.mxu0 0
    %745 = vmatprep.subr.bf16.mxu0 0
    %746 = vmatpush2.bf16.msra.mxu0 0
    %747 = vmatprep.subr.bf16.mxu0 0
    %748 = vmatpush2.bf16.msra.mxu0 0
    %749 = vmatprep.subr.bf16.mxu0 0
    %750 = vmatpush2.bf16.msra.mxu0 0
    %751 = vmatprep.subr.bf16.mxu0 0
    %752 = vmatpush2.bf16.msra.mxu0 0
    %753 = vmatprep.subr.bf16.mxu0 0
    %754 = vmatpush2.bf16.msra.mxu0 0
    %755 = vmatprep.subr.bf16.mxu0 0
    %756 = vmatpush2.bf16.msra.mxu0 0
    %757 = vmatprep.mubr.bf16.mxu0 0
    %758 = vmatmul.mubr.bf16.gmra.mxu0 %v600
    %v759 = vpop.f32.mrf.mxu0
    %v760 = vadd.f32 %v719, %v759
    %v761 = vpop.f32.mrf.mxu0
    %v762 = vadd.f32 %v721, %v761
    %v763 = vpop.f32.mrf.mxu0
    %v764 = vpop.f32.mrf.mxu0
    %765 = vdwg.mxu0
    %v766 = vadd.f32 %v678, %v680
    %v767 = vadd.f32 %v766, %v760
    %v768 = vadd.f32 %v767, %v762
    %769 = vadd.xlane.f32.xlu0 %v768
    %v770 = vpop.xlane.xlu0 %769
    %v771 = vmul.f32 %v678, %v678
    %v772 = vmul.f32 %v680, %v680
    %v773 = vmul.f32 %v760, %v760
    %v774 = vmul.f32 %v762, %v762
    %v775 = vadd.f32 %v771, %v772
    %v776 = vadd.f32 %v775, %v773
    %v777 = vadd.f32 %v776, %v774
    %778 = vadd.xlane.f32.xlu0 %v777
    %v779 = vpop.xlane.xlu0 %778
    %v780 = vmul.f32 %v770, 0.001953125
    %v781 = vmul.f32 %v779, 0.001953125
    %v782 = vmul.f32 %v780, %v780
    %v783 = vsub.f32 %v781, %v782
    %v784 = vsub.f32 %v678, %v780
    %v785 = vsub.f32 %v680, %v780
    %v786 = vsub.f32 %v760, %v780
    %v787 = vsub.f32 %v762, %v780
    %v788 = vadd.f32 %v783, 1e-05
    %v789 = vrsqrt.pop %v788
    %v790 = vmul.f32 %v784, %v789
    %v791 = vmul.f32 %v785, %v789
    %v792 = vmul.f32 %v786, %v789
    %v793 = vmul.f32 %v787, %v789
    %v794 = vld [vmem:[%s3] sm:$0xf]
    %v796 = vlaneseq
    %v797 = vshrl.u32 %v796, 7
    %v798 = vsub.s32 0, %v797
    %v799 = vrot.slane %v794, %v798
    %v800 = vlaneseq
    %v801 = vshrl.u32 %v800, 7
    %v802 = vsub.s32 1, %v801
    %v803 = vrot.slane %v794, %v802
    %v804 = vlaneseq
    %v805 = vshrl.u32 %v804, 7
    %v806 = vsub.s32 2, %v805
    %v807 = vrot.slane %v794, %v806
    %v808 = vlaneseq
    %v809 = vshrl.u32 %v808, 7
    %v810 = vsub.s32 3, %v809
    %v811 = vrot.slane %v794, %v810
    %v816 = vmul.f32 %v790, %v799
    %v817 = vmul.f32 %v791, %v803
    %v818 = vmul.f32 %v792, %v807
    %v819 = vmul.f32 %v793, %v811
    %v820 = vld [vmem:[#allocation8] sm:$0xf]
    %v822 = vlaneseq
    %v823 = vshrl.u32 %v822, 7
    %v824 = vsub.s32 0, %v823
    %v825 = vrot.slane %v820, %v824
    %v826 = vlaneseq
    %v827 = vshrl.u32 %v826, 7
    %v828 = vsub.s32 1, %v827
    %v829 = vrot.slane %v820, %v828
    %v830 = vlaneseq
    %v831 = vshrl.u32 %v830, 7
    %v832 = vsub.s32 2, %v831
    %v833 = vrot.slane %v820, %v832
    %v834 = vlaneseq
    %v835 = vshrl.u32 %v834, 7
    %v836 = vsub.s32 3, %v835
    %v837 = vrot.slane %v820, %v836
    %v842 = vadd.f32 %v816, %v825
    %v843 = vadd.f32 %v817, %v829
    %v844 = vadd.f32 %v818, %v833
    %v845 = vadd.f32 %v819, %v837
    %v846 = vmax.f32 %v842, 0.0
    %v847 = vmax.f32 %v843, 0.0
    %v848 = vmax.f32 %v844, 0.0
    %v849 = vmax.f32 %v845, 0.0
    %v850 = vpack.c.bf16 %v846, %v846
    %v851 = vpack.c.bf16 %v847, %v847
    %v852 = vpack.c.bf16 %v848, %v848
    %v853 = vpack.c.bf16 %v849, %v849
    %v854 = vld [vmem:[#allocation10] sm:$0xff]
    %v855 = vld [vmem:[#allocation10 + $0x8] sm:$0xff]
    %v856 = vld [vmem:[#allocation10 + $0x10] sm:$0xff]
    %v857 = vld [vmem:[#allocation10 + $0x18] sm:$0xff]
    %v858 = vld [vmem:[#allocation10 + $0x20] sm:$0xff]
    %v859 = vld [vmem:[#allocation10 + $0x28] sm:$0xff]
    %v860 = vld [vmem:[#allocation10 + $0x30] sm:$0xff]
    %v861 = vld [vmem:[#allocation10 + $0x38] sm:$0xff]
    %v862 = vld [vmem:[#allocation10 + $0x40] sm:$0xff]
    %v863 = vld [vmem:[#allocation10 + $0x48] sm:$0xff]
    %v864 = vld [vmem:[#allocation10 + $0x50] sm:$0xff]
    %v865 = vld [vmem:[#allocation10 + $0x58] sm:$0xff]
    %v866 = vld [vmem:[#allocation10 + $0x60] sm:$0xff]
    %v867 = vld [vmem:[#allocation10 + $0x68] sm:$0xff]
    %v868 = vld [vmem:[#allocation10 + $0x70] sm:$0xff]
    %v869 = vld [vmem:[#allocation10 + $0x78] sm:$0xff]
    %v870 = vld [vmem:[#allocation10 + $0x80] sm:$0xff]
    %v871 = vld [vmem:[#allocation10 + $0x88] sm:$0xff]
    %v872 = vld [vmem:[#allocation10 + $0x90] sm:$0xff]
    %v873 = vld [vmem:[#allocation10 + $0x98] sm:$0xff]
    %v874 = vld [vmem:[#allocation10 + $0xa0] sm:$0xff]
    %v875 = vld [vmem:[#allocation10 + $0xa8] sm:$0xff]
    %v876 = vld [vmem:[#allocation10 + $0xb0] sm:$0xff]
    %v877 = vld [vmem:[#allocation10 + $0xb8] sm:$0xff]
    %v878 = vld [vmem:[#allocation10 + $0xc0] sm:$0xff]
    %v879 = vld [vmem:[#allocation10 + $0xc8] sm:$0xff]
    %v880 = vld [vmem:[#allocation10 + $0xd0] sm:$0xff]
    %v881 = vld [vmem:[#allocation10 + $0xd8] sm:$0xff]
    %v882 = vld [vmem:[#allocation10 + $0xe0] sm:$0xff]
    %v883 = vld [vmem:[#allocation10 + $0xe8] sm:$0xff]
    %v884 = vld [vmem:[#allocation10 + $0xf0] sm:$0xff]
    %v885 = vld [vmem:[#allocation10 + $0xf8] sm:$0xff]
    %v886 = vld [vmem:[#allocation10 + $0x100] sm:$0xff]
    %v887 = vld [vmem:[#allocation10 + $0x108] sm:$0xff]
    %v888 = vld [vmem:[#allocation10 + $0x110] sm:$0xff]
    %v889 = vld [vmem:[#allocation10 + $0x118] sm:$0xff]
    %v890 = vld [vmem:[#allocation10 + $0x120] sm:$0xff]
    %v891 = vld [vmem:[#allocation10 + $0x128] sm:$0xff]
    %v892 = vld [vmem:[#allocation10 + $0x130] sm:$0xff]
    %v893 = vld [vmem:[#allocation10 + $0x138] sm:$0xff]
    %v894 = vld [vmem:[#allocation10 + $0x140] sm:$0xff]
    %v895 = vld [vmem:[#allocation10 + $0x148] sm:$0xff]
    %v896 = vld [vmem:[#allocation10 + $0x150] sm:$0xff]
    %v897 = vld [vmem:[#allocation10 + $0x158] sm:$0xff]
    %v898 = vld [vmem:[#allocation10 + $0x160] sm:$0xff]
    %v899 = vld [vmem:[#allocation10 + $0x168] sm:$0xff]
    %v900 = vld [vmem:[#allocation10 + $0x170] sm:$0xff]
    %v901 = vld [vmem:[#allocation10 + $0x178] sm:$0xff]
    %v902 = vld [vmem:[#allocation10 + $0x180] sm:$0xff]
    %v903 = vld [vmem:[#allocation10 + $0x188] sm:$0xff]
    %v904 = vld [vmem:[#allocation10 + $0x190] sm:$0xff]
    %v905 = vld [vmem:[#allocation10 + $0x198] sm:$0xff]
    %v906 = vld [vmem:[#allocation10 + $0x1a0] sm:$0xff]
    %v907 = vld [vmem:[#allocation10 + $0x1a8] sm:$0xff]
    %v908 = vld [vmem:[#allocation10 + $0x1b0] sm:$0xff]
    %v909 = vld [vmem:[#allocation10 + $0x1b8] sm:$0xff]
    %v910 = vld [vmem:[#allocation10 + $0x1c0] sm:$0xff]
    %v911 = vld [vmem:[#allocation10 + $0x1c8] sm:$0xff]
    %v912 = vld [vmem:[#allocation10 + $0x1d0] sm:$0xff]
    %v913 = vld [vmem:[#allocation10 + $0x1d8] sm:$0xff]
    %v914 = vld [vmem:[#allocation10 + $0x1e0] sm:$0xff]
    %v915 = vld [vmem:[#allocation10 + $0x1e8] sm:$0xff]
    %v916 = vld [vmem:[#allocation10 + $0x1f0] sm:$0xff]
    %v917 = vld [vmem:[#allocation10 + $0x1f8] sm:$0xff]
    %v918 = vld [vmem:[%s6] sm:$0x3]
    %v920 = vlaneseq
    %v921 = vshrl.u32 %v920, 7
    %v922 = vsub.s32 0, %v921
    %v923 = vrot.slane %v918, %v922
    %v924 = vlaneseq
    %v925 = vshrl.u32 %v924, 7
    %v926 = vsub.s32 1, %v925
    %v927 = vrot.slane %v918, %v926
    %v994 = vunpack.c.l.b16 %v854
    %v995 = vunpack.c.h.b16 %v854
    %v996 = vunpack.c.l.b16 %v855
    %v997 = vunpack.c.h.b16 %v855
    %v998 = vunpack.c.l.b16 %v856
    %v999 = vunpack.c.h.b16 %v856
    %v1000 = vunpack.c.l.b16 %v857
    %v1001 = vunpack.c.h.b16 %v857
    %v1002 = vunpack.c.l.b16 %v858
    %v1003 = vunpack.c.h.b16 %v858
    %v1004 = vunpack.c.l.b16 %v859
    %v1005 = vunpack.c.h.b16 %v859
    %v1006 = vunpack.c.l.b16 %v860
    %v1007 = vunpack.c.h.b16 %v860
    %v1008 = vunpack.c.l.b16 %v861
    %v1009 = vunpack.c.h.b16 %v861
    %v1010 = vunpack.c.l.b16 %v862
    %v1011 = vunpack.c.h.b16 %v862
    %v1012 = vunpack.c.l.b16 %v863
    %v1013 = vunpack.c.h.b16 %v863
    %v1014 = vunpack.c.l.b16 %v864
    %v1015 = vunpack.c.h.b16 %v864
    %v1016 = vunpack.c.l.b16 %v865
    %v1017 = vunpack.c.h.b16 %v865
    %v1018 = vunpack.c.l.b16 %v866
    %v1019 = vunpack.c.h.b16 %v866
    %v1020 = vunpack.c.l.b16 %v867
    %v1021 = vunpack.c.h.b16 %v867
    %v1022 = vunpack.c.l.b16 %v868
    %v1023 = vunpack.c.h.b16 %v868
    %v1024 = vunpack.c.l.b16 %v869
    %v1025 = vunpack.c.h.b16 %v869
    %v1026 = vunpack.c.l.b16 %v870
    %v1027 = vunpack.c.h.b16 %v870
    %v1028 = vunpack.c.l.b16 %v871
    %v1029 = vunpack.c.h.b16 %v871
    %v1030 = vunpack.c.l.b16 %v872
    %v1031 = vunpack.c.h.b16 %v872
    %v1032 = vunpack.c.l.b16 %v873
    %v1033 = vunpack.c.h.b16 %v873
    %v1034 = vunpack.c.l.b16 %v874
    %v1035 = vunpack.c.h.b16 %v874
    %v1036 = vunpack.c.l.b16 %v875
    %v1037 = vunpack.c.h.b16 %v875
    %v1038 = vunpack.c.l.b16 %v876
    %v1039 = vunpack.c.h.b16 %v876
    %v1040 = vunpack.c.l.b16 %v877
    %v1041 = vunpack.c.h.b16 %v877
    %v1042 = vunpack.c.l.b16 %v878
    %v1043 = vunpack.c.h.b16 %v878
    %v1044 = vunpack.c.l.b16 %v879
    %v1045 = vunpack.c.h.b16 %v879
    %v1046 = vunpack.c.l.b16 %v880
    %v1047 = vunpack.c.h.b16 %v880
    %v1048 = vunpack.c.l.b16 %v881
    %v1049 = vunpack.c.h.b16 %v881
    %v1050 = vunpack.c.l.b16 %v882
    %v1051 = vunpack.c.h.b16 %v882
    %v1052 = vunpack.c.l.b16 %v883
    %v1053 = vunpack.c.h.b16 %v883
    %v1054 = vunpack.c.l.b16 %v884
    %v1055 = vunpack.c.h.b16 %v884
    %v1056 = vunpack.c.l.b16 %v885
    %v1057 = vunpack.c.h.b16 %v885
    %v1058 = vunpack.c.l.b16 %v886
    %v1059 = vunpack.c.h.b16 %v886
    %v1060 = vunpack.c.l.b16 %v887
    %v1061 = vunpack.c.h.b16 %v887
    %v1062 = vunpack.c.l.b16 %v888
    %v1063 = vunpack.c.h.b16 %v888
    %v1064 = vunpack.c.l.b16 %v889
    %v1065 = vunpack.c.h.b16 %v889
    %v1066 = vunpack.c.l.b16 %v890
    %v1067 = vunpack.c.h.b16 %v890
    %v1068 = vunpack.c.l.b16 %v891
    %v1069 = vunpack.c.h.b16 %v891
    %v1070 = vunpack.c.l.b16 %v892
    %v1071 = vunpack.c.h.b16 %v892
    %v1072 = vunpack.c.l.b16 %v893
    %v1073 = vunpack.c.h.b16 %v893
    %v1074 = vunpack.c.l.b16 %v894
    %v1075 = vunpack.c.h.b16 %v894
    %v1076 = vunpack.c.l.b16 %v895
    %v1077 = vunpack.c.h.b16 %v895
    %v1078 = vunpack.c.l.b16 %v896
    %v1079 = vunpack.c.h.b16 %v896
    %v1080 = vunpack.c.l.b16 %v897
    %v1081 = vunpack.c.h.b16 %v897
    %v1082 = vunpack.c.l.b16 %v898
    %v1083 = vunpack.c.h.b16 %v898
    %v1084 = vunpack.c.l.b16 %v899
    %v1085 = vunpack.c.h.b16 %v899
    %v1086 = vunpack.c.l.b16 %v900
    %v1087 = vunpack.c.h.b16 %v900
    %v1088 = vunpack.c.l.b16 %v901
    %v1089 = vunpack.c.h.b16 %v901
    %v1090 = vunpack.c.l.b16 %v902
    %v1091 = vunpack.c.h.b16 %v902
    %v1092 = vunpack.c.l.b16 %v903
    %v1093 = vunpack.c.h.b16 %v903
    %v1094 = vunpack.c.l.b16 %v904
    %v1095 = vunpack.c.h.b16 %v904
    %v1096 = vunpack.c.l.b16 %v905
    %v1097 = vunpack.c.h.b16 %v905
    %v1098 = vunpack.c.l.b16 %v906
    %v1099 = vunpack.c.h.b16 %v906
    %v1100 = vunpack.c.l.b16 %v907
    %v1101 = vunpack.c.h.b16 %v907
    %v1102 = vunpack.c.l.b16 %v908
    %v1103 = vunpack.c.h.b16 %v908
    %v1104 = vunpack.c.l.b16 %v909
    %v1105 = vunpack.c.h.b16 %v909
    %v1106 = vunpack.c.l.b16 %v910
    %v1107 = vunpack.c.h.b16 %v910
    %v1108 = vunpack.c.l.b16 %v911
    %v1109 = vunpack.c.h.b16 %v911
    %v1110 = vunpack.c.l.b16 %v912
    %v1111 = vunpack.c.h.b16 %v912
    %v1112 = vunpack.c.l.b16 %v913
    %v1113 = vunpack.c.h.b16 %v913
    %v1114 = vunpack.c.l.b16 %v914
    %v1115 = vunpack.c.h.b16 %v914
    %v1116 = vunpack.c.l.b16 %v915
    %v1117 = vunpack.c.h.b16 %v915
    %v1118 = vunpack.c.l.b16 %v916
    %v1119 = vunpack.c.h.b16 %v916
    %v1120 = vunpack.c.l.b16 %v917
    %v1121 = vunpack.c.h.b16 %v917
    %v1122 = vpack.c.b16 %v996, %v994
    %v1123 = vpack.c.b16 %v997, %v995
    %v1124 = vpack.c.b16 %v1000, %v998
    %v1125 = vpack.c.b16 %v1001, %v999
    %v1126 = vpack.c.b16 %v1004, %v1002
    %v1127 = vpack.c.b16 %v1005, %v1003
    %v1128 = vpack.c.b16 %v1008, %v1006
    %v1129 = vpack.c.b16 %v1009, %v1007
    %v1130 = vpack.c.b16 %v1012, %v1010
    %v1131 = vpack.c.b16 %v1013, %v1011
    %v1132 = vpack.c.b16 %v1016, %v1014
    %v1133 = vpack.c.b16 %v1017, %v1015
    %v1134 = vpack.c.b16 %v1020, %v1018
    %v1135 = vpack.c.b16 %v1021, %v1019
    %v1136 = vpack.c.b16 %v1024, %v1022
    %v1137 = vpack.c.b16 %v1025, %v1023
    %v1138 = vpack.c.b16 %v1028, %v1026
    %v1139 = vpack.c.b16 %v1029, %v1027
    %v1140 = vpack.c.b16 %v1032, %v1030
    %v1141 = vpack.c.b16 %v1033, %v1031
    %v1142 = vpack.c.b16 %v1036, %v1034
    %v1143 = vpack.c.b16 %v1037, %v1035
    %v1144 = vpack.c.b16 %v1040, %v1038
    %v1145 = vpack.c.b16 %v1041, %v1039
    %v1146 = vpack.c.b16 %v1044, %v1042
    %v1147 = vpack.c.b16 %v1045, %v1043
    %v1148 = vpack.c.b16 %v1048, %v1046
    %v1149 = vpack.c.b16 %v1049, %v1047
    %v1150 = vpack.c.b16 %v1052, %v1050
    %v1151 = vpack.c.b16 %v1053, %v1051
    %v1152 = vpack.c.b16 %v1056, %v1054
    %v1153 = vpack.c.b16 %v1057, %v1055
    %v1154 = vpack.c.b16 %v1060, %v1058
    %v1155 = vpack.c.b16 %v1061, %v1059
    %v1156 = vpack.c.b16 %v1064, %v1062
    %v1157 = vpack.c.b16 %v1065, %v1063
    %v1158 = vpack.c.b16 %v1068, %v1066
    %v1159 = vpack.c.b16 %v1069, %v1067
    %v1160 = vpack.c.b16 %v1072, %v1070
    %v1161 = vpack.c.b16 %v1073, %v1071
    %v1162 = vpack.c.b16 %v1076, %v1074
    %v1163 = vpack.c.b16 %v1077, %v1075
    %v1164 = vpack.c.b16 %v1080, %v1078
    %v1165 = vpack.c.b16 %v1081, %v1079
    %v1166 = vpack.c.b16 %v1084, %v1082
    %v1167 = vpack.c.b16 %v1085, %v1083
    %v1168 = vpack.c.b16 %v1088, %v1086
    %v1169 = vpack.c.b16 %v1089, %v1087
    %v1170 = vpack.c.b16 %v1092, %v1090
    %v1171 = vpack.c.b16 %v1093, %v1091
    %v1172 = vpack.c.b16 %v1096, %v1094
    %v1173 = vpack.c.b16 %v1097, %v1095
    %v1174 = vpack.c.b16 %v1100, %v1098
    %v1175 = vpack.c.b16 %v1101, %v1099
    %v1176 = vpack.c.b16 %v1104, %v1102
    %v1177 = vpack.c.b16 %v1105, %v1103
    %v1178 = vpack.c.b16 %v1108, %v1106
    %v1179 = vpack.c.b16 %v1109, %v1107
    %v1180 = vpack.c.b16 %v1112, %v1110
    %v1181 = vpack.c.b16 %v1113, %v1111
    %v1182 = vpack.c.b16 %v1116, %v1114
    %v1183 = vpack.c.b16 %v1117, %v1115
    %v1184 = vpack.c.b16 %v1120, %v1118
    %v1185 = vpack.c.b16 %v1121, %v1119
    %1250 = vmatprep.subr.bf16.mxu0 %v1137
    %1251 = vmatpush1.bf16.msra.mxu0 %v1136
    %1252 = vmatprep.subr.bf16.mxu0 %v1135
    %1253 = vmatpush1.bf16.msra.mxu0 %v1134
    %1254 = vmatprep.subr.bf16.mxu0 %v1133
    %1255 = vmatpush1.bf16.msra.mxu0 %v1132
    %1256 = vmatprep.subr.bf16.mxu0 %v1131
    %1257 = vmatpush1.bf16.msra.mxu0 %v1130
    %1258 = vmatprep.subr.bf16.mxu0 %v1129
    %1259 = vmatpush1.bf16.msra.mxu0 %v1128
    %1260 = vmatprep.subr.bf16.mxu0 %v1127
    %1261 = vmatpush1.bf16.msra.mxu0 %v1126
    %1262 = vmatprep.subr.bf16.mxu0 %v1125
    %1263 = vmatpush1.bf16.msra.mxu0 %v1124
    %1264 = vmatprep.subr.bf16.mxu0 %v1123
    %1265 = vmatpush1.bf16.msra.mxu0 %v1122
    %1266 = vmatprep.subr.bf16.mxu0 %v1153
    %1267 = vmatpush2.bf16.msra.mxu0 %v1152
    %1268 = vmatprep.subr.bf16.mxu0 %v1151
    %1269 = vmatpush2.bf16.msra.mxu0 %v1150
    %1270 = vmatprep.subr.bf16.mxu0 %v1149
    %1271 = vmatpush2.bf16.msra.mxu0 %v1148
    %1272 = vmatprep.subr.bf16.mxu0 %v1147
    %1273 = vmatpush2.bf16.msra.mxu0 %v1146
    %1274 = vmatprep.subr.bf16.mxu0 %v1145
    %1275 = vmatpush2.bf16.msra.mxu0 %v1144
    %1276 = vmatprep.subr.bf16.mxu0 %v1143
    %1277 = vmatpush2.bf16.msra.mxu0 %v1142
    %1278 = vmatprep.subr.bf16.mxu0 %v1141
    %1279 = vmatpush2.bf16.msra.mxu0 %v1140
    %1280 = vmatprep.subr.bf16.mxu0 %v1139
    %1281 = vmatpush2.bf16.msra.mxu0 %v1138
    %1282 = vmatprep.mubr.bf16.mxu0 %v851
    %1283 = vmatmul.mubr.bf16.gmra.mxu0 %v850
    %v1284 = vpop.f32.mrf.mxu0
    %v1285 = vadd.f32 %v923, %v1284
    %v1286 = vpop.f32.mrf.mxu0
    %v1287 = vadd.f32 %v927, %v1286
    %v1288 = vpop.f32.mrf.mxu0
    %v1289 = vpop.f32.mrf.mxu0
    %1290 = vdwg.mxu0
    %1291 = vmatprep.subr.bf16.mxu0 %v1169
    %1292 = vmatpush1.bf16.msra.mxu0 %v1168
    %1293 = vmatprep.subr.bf16.mxu0 %v1167
    %1294 = vmatpush1.bf16.msra.mxu0 %v1166
    %1295 = vmatprep.subr.bf16.mxu0 %v1165
    %1296 = vmatpush1.bf16.msra.mxu0 %v1164
    %1297 = vmatprep.subr.bf16.mxu0 %v1163
    %1298 = vmatpush1.bf16.msra.mxu0 %v1162
    %1299 = vmatprep.subr.bf16.mxu0 %v1161
    %1300 = vmatpush1.bf16.msra.mxu0 %v1160
    %1301 = vmatprep.subr.bf16.mxu0 %v1159
    %1302 = vmatpush1.bf16.msra.mxu0 %v1158
    %1303 = vmatprep.subr.bf16.mxu0 %v1157
    %1304 = vmatpush1.bf16.msra.mxu0 %v1156
    %1305 = vmatprep.subr.bf16.mxu0 %v1155
    %1306 = vmatpush1.bf16.msra.mxu0 %v1154
    %1307 = vmatprep.subr.bf16.mxu0 %v1185
    %1308 = vmatpush2.bf16.msra.mxu0 %v1184
    %1309 = vmatprep.subr.bf16.mxu0 %v1183
    %1310 = vmatpush2.bf16.msra.mxu0 %v1182
    %1311 = vmatprep.subr.bf16.mxu0 %v1181
    %1312 = vmatpush2.bf16.msra.mxu0 %v1180
    %1313 = vmatprep.subr.bf16.mxu0 %v1179
    %1314 = vmatpush2.bf16.msra.mxu0 %v1178
    %1315 = vmatprep.subr.bf16.mxu0 %v1177
    %1316 = vmatpush2.bf16.msra.mxu0 %v1176
    %1317 = vmatprep.subr.bf16.mxu0 %v1175
    %1318 = vmatpush2.bf16.msra.mxu0 %v1174
    %1319 = vmatprep.subr.bf16.mxu0 %v1173
    %1320 = vmatpush2.bf16.msra.mxu0 %v1172
    %1321 = vmatprep.subr.bf16.mxu0 %v1171
    %1322 = vmatpush2.bf16.msra.mxu0 %v1170
    %1323 = vmatprep.mubr.bf16.mxu0 %v853
    %1324 = vmatmul.mubr.bf16.gmra.mxu0 %v852
    %v1325 = vpop.f32.mrf.mxu0
    %v1326 = vadd.f32 %v1285, %v1325
    %v1327 = vpop.f32.mrf.mxu0
    %v1328 = vadd.f32 %v1287, %v1327
    %v1329 = vpop.f32.mrf.mxu0
    %v1330 = vpop.f32.mrf.mxu0
    %1331 = vdwg.mxu0
    %1332 = vst [vmem:[#allocation11] sm:$0xff] %v1326
    %1333 = vst [vmem:[#allocation11 + $0x8] sm:$0xff] %v1328
    // Predicated region
    $region50: #{_layernorm_net_pallas.1} parent=1 // pred_check
      _
    $region51: #{_layernorm_net_pallas.1} parent=1 // pred_check_branch
      %1335 = sbr.rel (0) target = $region53
    $region52: #{_layernorm_net_pallas.1} parent=1 // pred_region
      %s1337 = ssub.s32 256, 256
      %1338 = vsyncadd [#allocation4], %s1337
      %s1340 = sshll.u32 [#allocation11], 4
      %s1341 = int_to_ptr.vmem [resolvable:$true] %s1340
      %1343 = dma.vmem_to_hbm [thread:$0]  %s1341, 256, %s7, [#allocation4]
    $region53: #{_layernorm_net_pallas.1} parent=1 // pred_fallthru
      _
    // Predicated region
    $region54: #{_layernorm_net_pallas.1} parent=1 // pred_check
      _
    $region55: #{_layernorm_net_pallas.1} parent=1 // pred_check_branch
      %1345 = sbr.rel (0) target = $region57
    $region56: #{_layernorm_net_pallas.1} parent=1 // pred_region
      %1346 = dma.done [#allocation4], 256
    $region57: #{_layernorm_net_pallas.1} parent=1 // pred_fallthru
      _
    %1347 = vsyncpa [#allocation3], 1
    %1348 = vsyncpa [#allocation6], 1
    %1349 = vsyncpa [#allocation9], 1
    %1350 = vsyncpa [#allocation4], 1

</llo_original>
